<compile_context>
chip_gen: v5e
topology: v5e:2x2
jax: 0.10.0
libtpu: 0.0.40
codegen_flags: <defaults>
</compile_context>

<pallas_src>
import functools

import jax
import jax.numpy as jnp
from jax.experimental import pallas as pl
from jax.experimental.pallas import tpu as pltpu

BN_EPS = 1e-5
TILE_M = 512          # M-tile: multiple of 16 (bf16 sublanes); ~85% of HBM roofline at 512
LANE = 128            # output-channel (store-side) lane padding
SUBLANE_BF16 = 16     # contraction-dim padding (bf16 sublane packing) — NOT 128


def _round_up(x, m):
    return (x + m - 1) // m * m


# --------------- Phase 1: conv-as-matmul, stats only (per-channel sum / sum-of-squares) ---------
def _conv_stats_kernel(p_ref, w_ref, stats_ref):
    # p_ref: (TILE_M, Kp) bf16   w_ref: (Kp, Cp) bf16
    # stats_ref: (2, Cp) f32 per-core partial accumulator (row0 = sum, row1 = sum of squares),
    #            resident across the inner 'arbitrary' grid axis.
    @pl.when(pl.program_id(1) == 0)
    def _():
        stats_ref[...] = jnp.zeros_like(stats_ref)

    y = jnp.dot(p_ref[...], w_ref[...], preferred_element_type=jnp.float32)
    stats_ref[0:1, :] += jnp.sum(y, axis=0, keepdims=True)
    stats_ref[1:2, :] += jnp.sum(y * y, axis=0, keepdims=True)


# --------------- Phase 2: recompute conv + fused BatchNorm scale/shift + ReLU -------------------
def _matmul_bn_relu_kernel(p_ref, w_ref, scale_ref, shift_ref, o_ref):
    # Recomputing y = patches @ W is cheaper than round-tripping an f32 stash through HBM.
    y = jnp.dot(p_ref[...], w_ref[...], preferred_element_type=jnp.float32)
    o_ref[...] = jnp.maximum(y * scale_ref[...] + shift_ref[...], 0.0).astype(o_ref.dtype)


def _im2col_nhwc(x_nhwc, kh, kw, stride, padding, dilation):
    # Explicit im2col in bf16 (XLA glue).  Rows are (n, oh, ow); columns are (tap, cin).
    N, H, W, C = x_nhwc.shape
    xp = jnp.pad(x_nhwc, ((0, 0), (padding, padding), (padding, padding), (0, 0)))
    OH = (H + 2 * padding - dilation * (kh - 1) - 1) // stride + 1
    OW = (W + 2 * padding - dilation * (kw - 1) - 1) // stride + 1
    cols = []
    for i in range(kh):
        for j in range(kw):
            r0, c0 = i * dilation, j * dilation
            cols.append(xp[:, r0:r0 + stride * (OH - 1) + 1:stride,
                              c0:c0 + stride * (OW - 1) + 1:stride, :])
    patches = jnp.stack(cols, axis=3)                       # (N, OH, OW, KH*KW, C)
    return patches.reshape(N * OH * OW, kh * kw * C), OH, OW


@functools.partial(jax.jit, static_argnames=("stride", "padding", "dilation"))
def conv_bn_relu(x_nchw, weight, bias, gamma, beta, *, stride, padding, dilation):
    """x_nchw: (N, Cin, H, W); weight: (Cout, Cin, KH, KW) (PyTorch conventions).

    `bias` is accepted for API parity but not used: under training-mode BatchNorm the per-channel
    conv bias cancels exactly when the batch mean is subtracted.
    """
    del bias
    N, Cin, H, W = x_nchw.shape
    Cout, _, KH, KW = weight.shape

    # --- glue: bf16 im2col (NHWC) + weight reshape, pad to (sublane-K, lane-Cout) sizes ---
    x_nhwc = jnp.transpose(x_nchw, (0, 2, 3, 1)).astype(jnp.bfloat16)
    patches, OH, OW = _im2col_nhwc(x_nhwc, KH, KW, stride, padding, dilation)   # (M, K) bf16
    M, K = patches.shape

    Kp = _round_up(K, SUBLANE_BF16)          # contraction dim: sublane padding only
    Cp = _round_up(Cout, LANE)               # store dim: lane-dense
    n_tiles = pl.cdiv(M, TILE_M)
    n_core = 2 if n_tiles >= 2 else 1        # v7x: split phase-1 M across the 2 TensorCores
    n_half = _round_up(n_tiles, n_core) // n_core
    n_tiles = n_half * n_core
    Mp = n_tiles * TILE_M

    patches_p = jnp.pad(patches, ((0, Mp - M), (0, Kp - K)))                    # bf16
    w_p = jnp.pad(
        jnp.transpose(weight, (2, 3, 1, 0)).reshape(K, Cout).astype(jnp.bfloat16),
        ((0, Kp - K), (0, Cp - Cout)))                                          # (Kp, Cp) bf16

    # VMEM budget (double-buffered in/out tiles + resident weight), with headroom.
    tile_bytes = TILE_M * Kp * 2 + Kp * Cp * 2 + TILE_M * Cp * 4 + 4 * Cp * 4
    vmem_limit = int(min(max(32 * 1024 * 1024, 4 * tile_bytes), 64 * 1024 * 1024))

    # --- phase 1: tiled matmul, per-channel sum / sumsq reduction over M (per-core partials) ---
    stats_wide = pl.pallas_call(
        _conv_stats_kernel,
        out_shape=jax.ShapeDtypeStruct((2, n_core * Cp), jnp.float32),
        grid=(n_core, n_half),
        in_specs=[
            pl.BlockSpec((TILE_M, Kp), lambda c, i: (c * n_half + i, 0)),
            pl.BlockSpec((Kp, Cp), lambda c, i: (0, 0)),
        ],
        out_specs=pl.BlockSpec((2, Cp), lambda c, i: (0, c)),      # per-core resident accumulator
        compiler_params=pltpu.CompilerParams(
            dimension_semantics=("parallel", "arbitrary"),
            vmem_limit_bytes=vmem_limit),
    )(patches_p, w_p)

    # --- glue: fold batch stats + gamma/beta into a single per-channel scale/shift (tiny op) ---
    # One-pass var = E[y^2] - E[y]^2 in f32; clamp guards tiny negative rounding.
    # (Padded channels: gamma=beta=0 -> scale=shift=0; padded rows: y=0 -> zero stats weight.)
    stats = jnp.sum(stats_wide.reshape(2, n_core, Cp), axis=1)     # (2, Cp)
    inv_m = 1.0 / float(M)
    mean = stats[0] * inv_m
    var = jnp.maximum(stats[1] * inv_m - mean * mean, 0.0)         # biased batch variance
    inv_std = jax.lax.rsqrt(var + BN_EPS)
    gamma_p = jnp.pad(gamma.astype(jnp.float32), (0, Cp - Cout))
    beta_p = jnp.pad(beta.astype(jnp.float32), (0, Cp - Cout))
    scale = (gamma_p * inv_std).reshape(1, Cp)
    shift = (beta_p - mean * gamma_p * inv_std).reshape(1, Cp)

    # --- phase 2: recompute conv tile + fused scale/shift + ReLU, independent per M-tile ---
    out_flat = pl.pallas_call(
        _matmul_bn_relu_kernel,
        out_shape=jax.ShapeDtypeStruct((Mp, Cp), jnp.float32),
        grid=(n_tiles,),
        in_specs=[
            pl.BlockSpec((TILE_M, Kp), lambda i: (i, 0)),
            pl.BlockSpec((Kp, Cp), lambda i: (0, 0)),
            pl.BlockSpec((1, Cp), lambda i: (0, 0)),
            pl.BlockSpec((1, Cp), lambda i: (0, 0)),
        ],
        out_specs=pl.BlockSpec((TILE_M, Cp), lambda i: (i, 0)),
        compiler_params=pltpu.CompilerParams(
            dimension_semantics=("parallel",),                     # shard across TCs on v7x
            vmem_limit_bytes=vmem_limit),
    )(patches_p, w_p, scale, shift)

    # NCHW f32 at the module boundary (matches the PyTorch module's output layout/dtype).
    out_nhwc = out_flat[:M, :Cout].reshape(N, OH, OW, Cout)
    return jnp.transpose(out_nhwc, (0, 3, 1, 2))


def _reference(x_nchw, weight, bias, gamma, beta, *, stride, padding, dilation):
    # Pure-JAX reference (conv with bf16 inputs / f32 accumulation to match kernel precision,
    # bias included, BN training-mode batch stats, ReLU).
    y = jax.lax.conv_general_dilated(
        x_nchw.astype(jnp.bfloat16), weight.astype(jnp.bfloat16),
        window_strides=(stride, stride),
        padding=[(padding, padding), (padding, padding)],
        rhs_dilation=(dilation, dilation),
        dimension_numbers=("NCHW", "OIHW", "NCHW"),
        preferred_element_type=jnp.float32)
    y = y + bias.reshape(1, -1, 1, 1)
    mean = jnp.mean(y, axis=(0, 2, 3), keepdims=True)
    var = jnp.mean((y - mean) ** 2, axis=(0, 2, 3), keepdims=True)
    y = (y - mean) * jax.lax.rsqrt(var + BN_EPS)
    y = y * gamma.reshape(1, -1, 1, 1) + beta.reshape(1, -1, 1, 1)
    return jnp.maximum(y, 0.0)


if __name__ == "__main__":
    # Small, PyTorch-consistent shapes: ConvBnReLU(in=4, out=8, k=3, stride=1, pad=1)
    N, Cin, H, W = 2, 4, 16, 16
    Cout, KH, KW = 8, 3, 3
    stride, padding, dilation = 1, 1, 1

    key = jax.random.PRNGKey(0)
    kx, kw, kb, kg, kbeta = jax.random.split(key, 5)

    x = jax.random.normal(kx, (N, Cin, H, W), dtype=jnp.float32)
    weight = jax.random.normal(kw, (Cout, Cin, KH, KW), dtype=jnp.float32) * 0.1
    bias = jax.random.normal(kb, (Cout,), dtype=jnp.float32) * 0.1
    gamma = 1.0 + 0.1 * jax.random.normal(kg, (Cout,), dtype=jnp.float32)
    beta = 0.1 * jax.random.normal(kbeta, (Cout,), dtype=jnp.float32)

    out = conv_bn_relu(x, weight, bias, gamma, beta,
                       stride=stride, padding=padding, dilation=dilation)
    out = jax.block_until_ready(out)

    ref = _reference(x, weight, bias, gamma, beta,
                     stride=stride, padding=padding, dilation=dilation)
    assert out.shape == (N, Cout, H, W), out.shape
    max_err = jnp.max(jnp.abs(out - ref))
    assert jnp.allclose(out, ref, atol=1e-2, rtol=1e-2), f"max err {max_err}"

    print("KERNEL_OK")
</pallas_src>

<mosaic_0001>
module attributes {stable_mosaic.version = 11 : i64} {
  func.func @_conv_stats_kernel(%arg0: i32, %arg1: i32, %arg2: memref<512x48xbf16, #tpu.memory_space<vmem>>, %arg3: memref<48x128xbf16, #tpu.memory_space<vmem>>, %arg4: memref<2x128xf32, #tpu.memory_space<vmem>>) attributes {dimension_semantics = [#tpu.dimension_semantics<parallel>, #tpu.dimension_semantics<arbitrary>], iteration_bounds = array<i64: 1, 1>, scalar_prefetch = 0 : i64, scratch_operands = 0 : i64, tpu.core_type = #tpu.core_type<tc>, window_params = [{transform_indices = @transform_0, window_bounds = array<i64: 512, 48>}, {pipeline_mode = #tpu.pipeline_mode<synchronous>, transform_indices = @transform_1, window_bounds = array<i64: 48, 128>}, {transform_indices = @transform_2, window_bounds = array<i64: 2, 128>}]} {
    %c0_i32 = arith.constant 0 : i32
    %0 = arith.cmpi eq, %arg1, %c0_i32 : i32
    %1 = arith.extui %0 : i1 to i32
    %c0_i32_0 = arith.constant 0 : i32
    %2 = arith.cmpi ne, %1, %c0_i32_0 : i32
    scf.if %2 {
      %cst_13 = arith.constant 0.000000e+00 : f32
      %17 = vector.broadcast %cst_13 : f32 to vector<2x128xf32>
      %c0_14 = arith.constant 0 : index
      %c0_15 = arith.constant 0 : index
      %18 = vector.load %arg4[%c0_14, %c0_15] : memref<2x128xf32, #tpu.memory_space<vmem>>, vector<2x128xf32>
      tpu.vector_store %arg4[%c0_14, %c0_15], %17 {strides = array<i32>} : memref<2x128xf32, #tpu.memory_space<vmem>>, vector<2x128xf32>,
    } else {
    }
    %c0 = arith.constant 0 : index
    %c0_1 = arith.constant 0 : index
    %3 = vector.load %arg2[%c0, %c0_1] : memref<512x48xbf16, #tpu.memory_space<vmem>>, vector<512x48xbf16>
    %c0_2 = arith.constant 0 : index
    %c0_3 = arith.constant 0 : index
    %4 = vector.load %arg3[%c0_2, %c0_3] : memref<48x128xbf16, #tpu.memory_space<vmem>>, vector<48x128xbf16>
    %cst = arith.constant dense<0.000000e+00> : vector<512x128xf32>
    %5 = tpu.matmul %3, %4, %cst {dimension_numbers = #tpu.dot_dimension_numbers<[1], [0], [0], [1], [0, 0, 1, 1], [], []>} : vector<512x48xbf16>, vector<48x128xbf16>, vector<512x128xf32> -> vector<512x128xf32>
    %c0_4 = arith.constant 0 : index
    %c0_5 = arith.constant 0 : index
    %6 = vector.load %arg4[%c0_4, %c0_5] : memref<2x128xf32, #tpu.memory_space<vmem>>, vector<1x128xf32>
    %cst_6 = arith.constant dense<0.000000e+00> : vector<128xf32>
    %7 = vector.multi_reduction <add>, %5, %cst_6 [0] : vector<512x128xf32> to vector<128xf32>
    %8 = vector.shape_cast %7 : vector<128xf32> to vector<1x128xf32>
    %9 = arith.addf %6, %8 : vector<1x128xf32>
    %c0_7 = arith.constant 0 : index
    %c0_8 = arith.constant 0 : index
    %10 = vector.load %arg4[%c0_7, %c0_8] : memref<2x128xf32, #tpu.memory_space<vmem>>, vector<1x128xf32>
    tpu.vector_store %arg4[%c0_7, %c0_8], %9 {strides = array<i32>} : memref<2x128xf32, #tpu.memory_space<vmem>>, vector<1x128xf32>,
    %c1 = arith.constant 1 : index
    %c0_9 = arith.constant 0 : index
    %11 = vector.load %arg4[%c1, %c0_9] : memref<2x128xf32, #tpu.memory_space<vmem>>, vector<1x128xf32>
    %12 = arith.mulf %5, %5 : vector<512x128xf32>
    %cst_10 = arith.constant dense<0.000000e+00> : vector<128xf32>
    %13 = vector.multi_reduction <add>, %12, %cst_10 [0] : vector<512x128xf32> to vector<128xf32>
    %14 = vector.shape_cast %13 : vector<128xf32> to vector<1x128xf32>
    %15 = arith.addf %11, %14 : vector<1x128xf32>
    %c1_11 = arith.constant 1 : index
    %c0_12 = arith.constant 0 : index
    %16 = vector.load %arg4[%c1_11, %c0_12] : memref<2x128xf32, #tpu.memory_space<vmem>>, vector<1x128xf32>
    tpu.vector_store %arg4[%c1_11, %c0_12], %15 {strides = array<i32>} : memref<2x128xf32, #tpu.memory_space<vmem>>, vector<1x128xf32>,
    return
  }
  func.func @transform_0(%arg0: i32, %arg1: i32) -> (i32, i32) {
    %c1_i32 = arith.constant 1 : i32
    %0 = arith.muli %arg0, %c1_i32 : i32
    %1 = arith.addi %0, %arg1 : i32
    %c0_i32 = arith.constant 0 : i32
    %c0_i32_0 = arith.constant 0 : i32
    return %1, %c0_i32 : i32, i32
  }
  func.func @transform_1(%arg0: i32, %arg1: i32) -> (i32, i32) {
    %c0_i32 = arith.constant 0 : i32
    %c0_i32_0 = arith.constant 0 : i32
    %c0_i32_1 = arith.constant 0 : i32
    return %c0_i32, %c0_i32_0 : i32, i32
  }
  func.func @transform_2(%arg0: i32, %arg1: i32) -> (i32, i32) {
    %c0_i32 = arith.constant 0 : i32
    %c0_i32_0 = arith.constant 0 : i32
    return %c0_i32, %arg0 : i32, i32
  }
}

module attributes {stable_mosaic.version = 11 : i64} {
  func.func @_matmul_bn_relu_kernel(%arg0: i32, %arg1: memref<512x48xbf16, #tpu.memory_space<vmem>>, %arg2: memref<48x128xbf16, #tpu.memory_space<vmem>>, %arg3: memref<1x128xf32, #tpu.memory_space<vmem>>, %arg4: memref<1x128xf32, #tpu.memory_space<vmem>>, %arg5: memref<512x128xf32, #tpu.memory_space<vmem>>) attributes {dimension_semantics = [#tpu.dimension_semantics<parallel>], iteration_bounds = array<i64: 1>, scalar_prefetch = 0 : i64, scratch_operands = 0 : i64, tpu.core_type = #tpu.core_type<tc>, window_params = [{transform_indices = @transform_0, window_bounds = array<i64: 512, 48>}, {pipeline_mode = #tpu.pipeline_mode<synchronous>, transform_indices = @transform_1, window_bounds = array<i64: 48, 128>}, {pipeline_mode = #tpu.pipeline_mode<synchronous>, transform_indices = @transform_2, window_bounds = array<i64: 1, 128>}, {pipeline_mode = #tpu.pipeline_mode<synchronous>, transform_indices = @transform_3, window_bounds = array<i64: 1, 128>}, {transform_indices = @transform_4, window_bounds = array<i64: 512, 128>}]} {
    %c0 = arith.constant 0 : index
    %c0_0 = arith.constant 0 : index
    %0 = vector.load %arg1[%c0, %c0_0] : memref<512x48xbf16, #tpu.memory_space<vmem>>, vector<512x48xbf16>
    %c0_1 = arith.constant 0 : index
    %c0_2 = arith.constant 0 : index
    %1 = vector.load %arg2[%c0_1, %c0_2] : memref<48x128xbf16, #tpu.memory_space<vmem>>, vector<48x128xbf16>
    %cst = arith.constant dense<0.000000e+00> : vector<512x128xf32>
    %2 = tpu.matmul %0, %1, %cst {dimension_numbers = #tpu.dot_dimension_numbers<[1], [0], [0], [1], [0, 0, 1, 1], [], []>} : vector<512x48xbf16>, vector<48x128xbf16>, vector<512x128xf32> -> vector<512x128xf32>
    %c0_3 = arith.constant 0 : index
    %c0_4 = arith.constant 0 : index
    %3 = vector.load %arg3[%c0_3, %c0_4] : memref<1x128xf32, #tpu.memory_space<vmem>>, vector<1x128xf32>
    %4 = vector.broadcast %3 : vector<1x128xf32> to vector<512x128xf32>
    %5 = arith.mulf %2, %4 : vector<512x128xf32>
    %c0_5 = arith.constant 0 : index
    %c0_6 = arith.constant 0 : index
    %6 = vector.load %arg4[%c0_5, %c0_6] : memref<1x128xf32, #tpu.memory_space<vmem>>, vector<1x128xf32>
    %7 = vector.broadcast %6 : vector<1x128xf32> to vector<512x128xf32>
    %8 = arith.addf %5, %7 : vector<512x128xf32>
    %cst_7 = arith.constant 0.000000e+00 : f32
    %9 = vector.broadcast %cst_7 : f32 to vector<512x128xf32>
    %10 = arith.maximumf %8, %9 : vector<512x128xf32>
    %c0_8 = arith.constant 0 : index
    %c0_9 = arith.constant 0 : index
    %11 = vector.load %arg5[%c0_8, %c0_9] : memref<512x128xf32, #tpu.memory_space<vmem>>, vector<512x128xf32>
    tpu.vector_store %arg5[%c0_8, %c0_9], %10 {strides = array<i32>} : memref<512x128xf32, #tpu.memory_space<vmem>>, vector<512x128xf32>,
    return
  }
  func.func @transform_0(%arg0: i32) -> (i32, i32) {
    %c0_i32 = arith.constant 0 : i32
    %c0_i32_0 = arith.constant 0 : i32
    return %arg0, %c0_i32 : i32, i32
  }
  func.func @transform_1(%arg0: i32) -> (i32, i32) {
    %c0_i32 = arith.constant 0 : i32
    %c0_i32_0 = arith.constant 0 : i32
    %c0_i32_1 = arith.constant 0 : i32
    return %c0_i32, %c0_i32_0 : i32, i32
  }
  func.func @transform_2(%arg0: i32) -> (i32, i32) {
    %c0_i32 = arith.constant 0 : i32
    %c0_i32_0 = arith.constant 0 : i32
    %c0_i32_1 = arith.constant 0 : i32
    return %c0_i32, %c0_i32_0 : i32, i32
  }
  func.func @transform_3(%arg0: i32) -> (i32, i32) {
    %c0_i32 = arith.constant 0 : i32
    %c0_i32_0 = arith.constant 0 : i32
    %c0_i32_1 = arith.constant 0 : i32
    return %c0_i32, %c0_i32_0 : i32, i32
  }
  func.func @transform_4(%arg0: i32) -> (i32, i32) {
    %c0_i32 = arith.constant 0 : i32
    %c0_i32_0 = arith.constant 0 : i32
    return %arg0, %c0_i32 : i32, i32
  }
}

</mosaic_0001>

<llo_original>
// kernel: conv_bn_relu.2
$region0: #{conv_bn_relu.2}
  #allocation0 [shape = 'u32[]', space=smem, size = 0x4, offset = 0x4, fixed_abs, tag = 'smem constant byte address 0x4 - core index']
  #allocation1 [shape = 'u32[72,128]{1,0:T(1,128)}', space=vmem, size = 0x9000, scoped, tag = 'internal scratch']
  %s0 = inlined_call_operand.vmem [shape: bf16[512,48], index: 0, kind: input, shape index: {}]
  %s1 = inlined_call_operand.vmem [shape: bf16[48,128], index: 1, kind: input, shape index: {}]
  %s2 = inlined_call_operand.vmem [shape: f32[2,128], index: 2, kind: output, shape index: {}]
  %s3 = sld [smem:[#allocation0]]
  $region22: #{conv_bn_relu.2} parent=0
    _
  %s5 = ssub.s32 1, %s3
  %s6 = scalar_select 0, %s5, %s3
  // Predicated region
  $region2: #{conv_bn_relu.2} parent=0 // pred_check
    _
  $region3: #{conv_bn_relu.2} parent=0 // pred_check_branch
    %8 = sbr.rel (0) target = $region5
  $region4: #{conv_bn_relu.2} parent=0 // pred_region
    %s9 = sadd.s32 0, 0
    %s10 = smul.u32 64, %s9
    %p11 = scmp.lt.s32.totalorder %s10, 63
    %s12 = scalar_select %p11, %s10, 63
    %s13 = smul.addr %s12, 4
    %s14 = scalar_lea.vmem %s0, %s13
    %s15 = sadd.s32 0, 0
    %s16 = smul.u32 64, %s15
  $region5: #{conv_bn_relu.2} parent=0 // pred_fallthru
    _
  // Predicated region
  $region6: #{conv_bn_relu.2} parent=0 // pred_check
    _
  $region7: #{conv_bn_relu.2} parent=0 // pred_check_branch
    %18 = sbr.rel (0) target = $region9
  $region8: #{conv_bn_relu.2} parent=0 // pred_region
    _
  $region9: #{conv_bn_relu.2} parent=0 // pred_fallthru
    _
  %s19 = sadd.s32 0, 0
  %s20 = smul.u32 64, %s19
  %p21 = scmp.lt.s32.totalorder %s20, 63
  %s22 = scalar_select %p21, %s20, 63
  %s23 = smul.addr %s22, 4
  %s24 = scalar_lea.vmem %s0, %s23
  %s25 = sadd.s32 0, 0
  %s26 = smul.u32 64, %s25
  %p27 = scmp.lt.s32.totalorder %s26, 63
  %s28 = scalar_select %p27, %s26, 63
  %s29 = smul.addr %s28, 4
  %s30 = scalar_lea.vmem %s0, %s29
  %s31 = sadd.s32 0, 0
  %s32 = smul.u32 64, %s31
  %p34 = scmp.eq.s32.totalorder 0, 0
  // Predicated region
  $region10: #{conv_bn_relu.2} parent=0 // pred_check
    %p35 = pneg %p34
  $region11: #{conv_bn_relu.2} parent=0 // pred_check_branch
    %37 = sbr.rel (%p35) target = $region13
  $region12: #{conv_bn_relu.2} parent=0 // pred_region
    %38 = vst [vmem:[%s2] sm:$0x3] 0.0
  $region13: #{conv_bn_relu.2} parent=0 // pred_fallthru
    _
  %v39 = vld [vmem:[%s30] sm:$0xf]
  %v40 = vld [vmem:[%s30 + $0x4] sm:$0xf]
  %v41 = vld [vmem:[%s30 + $0x8] sm:$0xf]
  %v42 = vld [vmem:[%s30 + $0xc] sm:$0xf]
  %v43 = vld [vmem:[%s30 + $0x10] sm:$0xf]
  %v44 = vld [vmem:[%s30 + $0x14] sm:$0xf]
  %v45 = vld [vmem:[%s30 + $0x18] sm:$0xf]
  %v46 = vld [vmem:[%s30 + $0x1c] sm:$0xf]
  %v47 = vld [vmem:[%s30 + $0x20] sm:$0xf]
  %v48 = vld [vmem:[%s30 + $0x24] sm:$0xf]
  %v49 = vld [vmem:[%s30 + $0x28] sm:$0xf]
  %v50 = vld [vmem:[%s30 + $0x2c] sm:$0xf]
  %v51 = vld [vmem:[%s30 + $0x30] sm:$0xf]
  %v52 = vld [vmem:[%s30 + $0x34] sm:$0xf]
  %v53 = vld [vmem:[%s30 + $0x38] sm:$0xf]
  %v54 = vld [vmem:[%s30 + $0x3c] sm:$0xf]
  %v55 = vld [vmem:[%s30 + $0x40] sm:$0xf]
  %v56 = vld [vmem:[%s30 + $0x44] sm:$0xf]
  %v57 = vld [vmem:[%s30 + $0x48] sm:$0xf]
  %v58 = vld [vmem:[%s30 + $0x4c] sm:$0xf]
  %v59 = vld [vmem:[%s30 + $0x50] sm:$0xf]
  %v60 = vld [vmem:[%s30 + $0x54] sm:$0xf]
  %v61 = vld [vmem:[%s30 + $0x58] sm:$0xf]
  %v62 = vld [vmem:[%s30 + $0x5c] sm:$0xf]
  %v63 = vld [vmem:[%s30 + $0x60] sm:$0xf]
  %v64 = vld [vmem:[%s30 + $0x64] sm:$0xf]
  %v65 = vld [vmem:[%s30 + $0x68] sm:$0xf]
  %v66 = vld [vmem:[%s30 + $0x6c] sm:$0xf]
  %v67 = vld [vmem:[%s30 + $0x70] sm:$0xf]
  %v68 = vld [vmem:[%s30 + $0x74] sm:$0xf]
  %v69 = vld [vmem:[%s30 + $0x78] sm:$0xf]
  %v70 = vld [vmem:[%s30 + $0x7c] sm:$0xf]
  %v71 = vld [vmem:[%s30 + $0x80] sm:$0xf]
  %v72 = vld [vmem:[%s30 + $0x84] sm:$0xf]
  %v73 = vld [vmem:[%s30 + $0x88] sm:$0xf]
  %v74 = vld [vmem:[%s30 + $0x8c] sm:$0xf]
  %v75 = vld [vmem:[%s30 + $0x90] sm:$0xf]
  %v76 = vld [vmem:[%s30 + $0x94] sm:$0xf]
  %v77 = vld [vmem:[%s30 + $0x98] sm:$0xf]
  %v78 = vld [vmem:[%s30 + $0x9c] sm:$0xf]
  %v79 = vld [vmem:[%s30 + $0xa0] sm:$0xf]
  %v80 = vld [vmem:[%s30 + $0xa4] sm:$0xf]
  %v81 = vld [vmem:[%s30 + $0xa8] sm:$0xf]
  %v82 = vld [vmem:[%s30 + $0xac] sm:$0xf]
  %v83 = vld [vmem:[%s30 + $0xb0] sm:$0xf]
  %v84 = vld [vmem:[%s30 + $0xb4] sm:$0xf]
  %v85 = vld [vmem:[%s30 + $0xb8] sm:$0xf]
  %v86 = vld [vmem:[%s30 + $0xbc] sm:$0xf]
  %v87 = vld [vmem:[%s30 + $0xc0] sm:$0xf]
  %v88 = vld [vmem:[%s30 + $0xc4] sm:$0xf]
  %v89 = vld [vmem:[%s30 + $0xc8] sm:$0xf]
  %v90 = vld [vmem:[%s30 + $0xcc] sm:$0xf]
  %v91 = vld [vmem:[%s30 + $0xd0] sm:$0xf]
  %v92 = vld [vmem:[%s30 + $0xd4] sm:$0xf]
  %v93 = vld [vmem:[%s30 + $0xd8] sm:$0xf]
  %v94 = vld [vmem:[%s30 + $0xdc] sm:$0xf]
  %v95 = vld [vmem:[%s30 + $0xe0] sm:$0xf]
  %v96 = vld [vmem:[%s30 + $0xe4] sm:$0xf]
  %v97 = vld [vmem:[%s30 + $0xe8] sm:$0xf]
  %v98 = vld [vmem:[%s30 + $0xec] sm:$0xf]
  %v99 = vld [vmem:[%s30 + $0xf0] sm:$0xf]
  %v100 = vld [vmem:[%s30 + $0xf4] sm:$0xf]
  %v101 = vld [vmem:[%s30 + $0xf8] sm:$0xf]
  %v102 = vld [vmem:[%s30 + $0xfc] sm:$0xf]
  %v103 = vld [vmem:[%s1] sm:$0xf]
  %v104 = vld [vmem:[%s1 + $0x4] sm:$0xf]
  %v105 = vld [vmem:[%s1 + $0x8] sm:$0xf]
  %v106 = vld [vmem:[%s1 + $0xc] sm:$0xf]
  %v107 = vld [vmem:[%s1 + $0x10] sm:$0xf]
  %v108 = vld [vmem:[%s1 + $0x14] sm:$0xf]
  %v173 = vunpack.c.l.b16 %v39
  %v174 = vunpack.c.l.b16 %v40
  %v175 = vunpack.c.l.b16 %v41
  %v176 = vunpack.c.l.b16 %v42
  %v177 = vunpack.c.l.b16 %v43
  %v178 = vunpack.c.l.b16 %v44
  %v179 = vunpack.c.l.b16 %v45
  %v180 = vunpack.c.l.b16 %v46
  %v181 = vunpack.c.l.b16 %v47
  %v182 = vunpack.c.l.b16 %v48
  %v183 = vunpack.c.l.b16 %v49
  %v184 = vunpack.c.l.b16 %v50
  %v185 = vunpack.c.l.b16 %v51
  %v186 = vunpack.c.l.b16 %v52
  %v187 = vunpack.c.l.b16 %v53
  %v188 = vunpack.c.l.b16 %v54
  %v189 = vunpack.c.l.b16 %v55
  %v190 = vunpack.c.l.b16 %v56
  %v191 = vunpack.c.l.b16 %v57
  %v192 = vunpack.c.l.b16 %v58
  %v193 = vunpack.c.l.b16 %v59
  %v194 = vunpack.c.l.b16 %v60
  %v195 = vunpack.c.l.b16 %v61
  %v196 = vunpack.c.l.b16 %v62
  %v197 = vunpack.c.l.b16 %v63
  %v198 = vunpack.c.l.b16 %v64
  %v199 = vunpack.c.l.b16 %v65
  %v200 = vunpack.c.l.b16 %v66
  %v201 = vunpack.c.l.b16 %v67
  %v202 = vunpack.c.l.b16 %v68
  %v203 = vunpack.c.l.b16 %v69
  %v204 = vunpack.c.l.b16 %v70
  %v205 = vunpack.c.l.b16 %v71
  %v206 = vunpack.c.l.b16 %v72
  %v207 = vunpack.c.l.b16 %v73
  %v208 = vunpack.c.l.b16 %v74
  %v209 = vunpack.c.l.b16 %v75
  %v210 = vunpack.c.l.b16 %v76
  %v211 = vunpack.c.l.b16 %v77
  %v212 = vunpack.c.l.b16 %v78
  %v213 = vunpack.c.l.b16 %v79
  %v214 = vunpack.c.l.b16 %v80
  %v215 = vunpack.c.l.b16 %v81
  %v216 = vunpack.c.l.b16 %v82
  %v217 = vunpack.c.l.b16 %v83
  %v218 = vunpack.c.l.b16 %v84
  %v219 = vunpack.c.l.b16 %v85
  %v220 = vunpack.c.l.b16 %v86
  %v221 = vunpack.c.l.b16 %v87
  %v222 = vunpack.c.l.b16 %v88
  %v223 = vunpack.c.l.b16 %v89
  %v224 = vunpack.c.l.b16 %v90
  %v225 = vunpack.c.l.b16 %v91
  %v226 = vunpack.c.l.b16 %v92
  %v227 = vunpack.c.l.b16 %v93
  %v228 = vunpack.c.l.b16 %v94
  %v229 = vunpack.c.l.b16 %v95
  %v230 = vunpack.c.l.b16 %v96
  %v231 = vunpack.c.l.b16 %v97
  %v232 = vunpack.c.l.b16 %v98
  %v233 = vunpack.c.l.b16 %v99
  %v234 = vunpack.c.l.b16 %v100
  %v235 = vunpack.c.l.b16 %v101
  %v236 = vunpack.c.l.b16 %v102
  %v237 = vpack.c.b16 %v174, %v173
  %v238 = vpack.c.b16 %v176, %v175
  %v239 = vpack.c.b16 %v178, %v177
  %v240 = vpack.c.b16 %v180, %v179
  %v241 = vpack.c.b16 %v182, %v181
  %v242 = vpack.c.b16 %v184, %v183
  %v243 = vpack.c.b16 %v186, %v185
  %v244 = vpack.c.b16 %v188, %v187
  %v245 = vpack.c.b16 %v190, %v189
  %v246 = vpack.c.b16 %v192, %v191
  %v247 = vpack.c.b16 %v194, %v193
  %v248 = vpack.c.b16 %v196, %v195
  %v249 = vpack.c.b16 %v198, %v197
  %v250 = vpack.c.b16 %v200, %v199
  %v251 = vpack.c.b16 %v202, %v201
  %v252 = vpack.c.b16 %v204, %v203
  %v253 = vpack.c.b16 %v206, %v205
  %v254 = vpack.c.b16 %v208, %v207
  %v255 = vpack.c.b16 %v210, %v209
  %v256 = vpack.c.b16 %v212, %v211
  %v257 = vpack.c.b16 %v214, %v213
  %v258 = vpack.c.b16 %v216, %v215
  %v259 = vpack.c.b16 %v218, %v217
  %v260 = vpack.c.b16 %v220, %v219
  %v261 = vpack.c.b16 %v222, %v221
  %v262 = vpack.c.b16 %v224, %v223
  %v263 = vpack.c.b16 %v226, %v225
  %v264 = vpack.c.b16 %v228, %v227
  %v265 = vpack.c.b16 %v230, %v229
  %v266 = vpack.c.b16 %v232, %v231
  %v267 = vpack.c.b16 %v234, %v233
  %v268 = vpack.c.b16 %v236, %v235
  %v275 = vunpack.c.l.b16 %v103
  %v276 = vunpack.c.l.b16 %v104
  %v277 = vunpack.c.l.b16 %v105
  %v278 = vunpack.c.l.b16 %v106
  %v279 = vunpack.c.l.b16 %v107
  %v280 = vunpack.c.l.b16 %v108
  %v281 = vpack.c.b16 %v276, %v275
  %v282 = vpack.c.b16 %v278, %v277
  %v283 = vpack.c.b16 %v280, %v279
  %vm287 = vcmask 392192
  %v289 = vsel %vm287, %v237, 0
  %v292 = vsel %vm287, %v238, 0
  %v295 = vsel %vm287, %v239, 0
  %v298 = vsel %vm287, %v240, 0
  %v301 = vsel %vm287, %v241, 0
  %v304 = vsel %vm287, %v242, 0
  %v307 = vsel %vm287, %v243, 0
  %v310 = vsel %vm287, %v244, 0
  %v313 = vsel %vm287, %v245, 0
  %v316 = vsel %vm287, %v246, 0
  %v319 = vsel %vm287, %v247, 0
  %v322 = vsel %vm287, %v248, 0
  %v325 = vsel %vm287, %v249, 0
  %v328 = vsel %vm287, %v250, 0
  %v331 = vsel %vm287, %v251, 0
  %v334 = vsel %vm287, %v252, 0
  %v337 = vsel %vm287, %v253, 0
  %v340 = vsel %vm287, %v254, 0
  %v343 = vsel %vm287, %v255, 0
  %v346 = vsel %vm287, %v256, 0
  %v349 = vsel %vm287, %v257, 0
  %v352 = vsel %vm287, %v258, 0
  %v355 = vsel %vm287, %v259, 0
  %v358 = vsel %vm287, %v260, 0
  %v361 = vsel %vm287, %v261, 0
  %v364 = vsel %vm287, %v262, 0
  %v367 = vsel %vm287, %v263, 0
  %v370 = vsel %vm287, %v264, 0
  %v373 = vsel %vm287, %v265, 0
  %v376 = vsel %vm287, %v266, 0
  %v379 = vsel %vm287, %v267, 0
  %v382 = vsel %vm287, %v268, 0
  %384 = vmatpush.bf16.msra.mxu0 0
  %385 = vmatpush.bf16.msra.mxu0 0
  %386 = vmatpush.bf16.msra.mxu0 0
  %387 = vmatpush.bf16.msra.mxu0 0
  %388 = vmatpush.bf16.msra.mxu0 0
  %389 = vmatpush.bf16.msra.mxu0 %v283
  %390 = vmatpush.bf16.msra.mxu0 %v282
  %391 = vmatpush.bf16.msra.mxu0 %v281
  %392 = vmatmul.bf16.gmra.mxu0 %v289
  %v393 = vpop.f32.mrf.mxu0
  %v394 = vadd.f32 0.0, %v393
  %v395 = vpop.f32.mrf.mxu0
  %v396 = vadd.f32 0.0, %v395
  %397 = vmatmul.bf16.gmra.mxu0 %v292
  %v398 = vpop.f32.mrf.mxu0
  %v399 = vadd.f32 0.0, %v398
  %v400 = vpop.f32.mrf.mxu0
  %v401 = vadd.f32 0.0, %v400
  %402 = vmatmul.bf16.gmra.mxu0 %v295
  %v403 = vpop.f32.mrf.mxu0
  %v404 = vadd.f32 0.0, %v403
  %v405 = vpop.f32.mrf.mxu0
  %v406 = vadd.f32 0.0, %v405
  %407 = vmatmul.bf16.gmra.mxu0 %v298
  %v408 = vpop.f32.mrf.mxu0
  %v409 = vadd.f32 0.0, %v408
  %v410 = vpop.f32.mrf.mxu0
  %v411 = vadd.f32 0.0, %v410
  %412 = vmatmul.bf16.gmra.mxu0 %v301
  %v413 = vpop.f32.mrf.mxu0
  %v414 = vadd.f32 0.0, %v413
  %v415 = vpop.f32.mrf.mxu0
  %v416 = vadd.f32 0.0, %v415
  %417 = vmatmul.bf16.gmra.mxu0 %v304
  %v418 = vpop.f32.mrf.mxu0
  %v419 = vadd.f32 0.0, %v418
  %v420 = vpop.f32.mrf.mxu0
  %v421 = vadd.f32 0.0, %v420
  %422 = vmatmul.bf16.gmra.mxu0 %v307
  %v423 = vpop.f32.mrf.mxu0
  %v424 = vadd.f32 0.0, %v423
  %v425 = vpop.f32.mrf.mxu0
  %v426 = vadd.f32 0.0, %v425
  %427 = vmatmul.bf16.gmra.mxu0 %v310
  %v428 = vpop.f32.mrf.mxu0
  %v429 = vadd.f32 0.0, %v428
  %v430 = vpop.f32.mrf.mxu0
  %v431 = vadd.f32 0.0, %v430
  %432 = vmatmul.bf16.gmra.mxu0 %v313
  %v433 = vpop.f32.mrf.mxu0
  %v434 = vadd.f32 0.0, %v433
  %v435 = vpop.f32.mrf.mxu0
  %v436 = vadd.f32 0.0, %v435
  %437 = vmatmul.bf16.gmra.mxu0 %v316
  %v438 = vpop.f32.mrf.mxu0
  %v439 = vadd.f32 0.0, %v438
  %v440 = vpop.f32.mrf.mxu0
  %v441 = vadd.f32 0.0, %v440
  %442 = vmatmul.bf16.gmra.mxu0 %v319
  %v443 = vpop.f32.mrf.mxu0
  %v444 = vadd.f32 0.0, %v443
  %v445 = vpop.f32.mrf.mxu0
  %v446 = vadd.f32 0.0, %v445
  %447 = vmatmul.bf16.gmra.mxu0 %v322
  %v448 = vpop.f32.mrf.mxu0
  %v449 = vadd.f32 0.0, %v448
  %v450 = vpop.f32.mrf.mxu0
  %v451 = vadd.f32 0.0, %v450
  %452 = vmatmul.bf16.gmra.mxu0 %v325
  %v453 = vpop.f32.mrf.mxu0
  %v454 = vadd.f32 0.0, %v453
  %v455 = vpop.f32.mrf.mxu0
  %v456 = vadd.f32 0.0, %v455
  %457 = vmatmul.bf16.gmra.mxu0 %v328
  %v458 = vpop.f32.mrf.mxu0
  %v459 = vadd.f32 0.0, %v458
  %v460 = vpop.f32.mrf.mxu0
  %v461 = vadd.f32 0.0, %v460
  %462 = vmatmul.bf16.gmra.mxu0 %v331
  %v463 = vpop.f32.mrf.mxu0
  %v464 = vadd.f32 0.0, %v463
  %v465 = vpop.f32.mrf.mxu0
  %v466 = vadd.f32 0.0, %v465
  %467 = vmatmul.bf16.gmra.mxu0 %v334
  %v468 = vpop.f32.mrf.mxu0
  %v469 = vadd.f32 0.0, %v468
  %v470 = vpop.f32.mrf.mxu0
  %v471 = vadd.f32 0.0, %v470
  %472 = vmatmul.bf16.gmra.mxu0 %v337
  %v473 = vpop.f32.mrf.mxu0
  %v474 = vadd.f32 0.0, %v473
  %v475 = vpop.f32.mrf.mxu0
  %v476 = vadd.f32 0.0, %v475
  %477 = vmatmul.bf16.gmra.mxu0 %v340
  %v478 = vpop.f32.mrf.mxu0
  %v479 = vadd.f32 0.0, %v478
  %v480 = vpop.f32.mrf.mxu0
  %v481 = vadd.f32 0.0, %v480
  %482 = vmatmul.bf16.gmra.mxu0 %v343
  %v483 = vpop.f32.mrf.mxu0
  %v484 = vadd.f32 0.0, %v483
  %v485 = vpop.f32.mrf.mxu0
  %v486 = vadd.f32 0.0, %v485
  %487 = vmatmul.bf16.gmra.mxu0 %v346
  %v488 = vpop.f32.mrf.mxu0
  %v489 = vadd.f32 0.0, %v488
  %v490 = vpop.f32.mrf.mxu0
  %v491 = vadd.f32 0.0, %v490
  %492 = vmatmul.bf16.gmra.mxu0 %v349
  %v493 = vpop.f32.mrf.mxu0
  %v494 = vadd.f32 0.0, %v493
  %v495 = vpop.f32.mrf.mxu0
  %v496 = vadd.f32 0.0, %v495
  %497 = vmatmul.bf16.gmra.mxu0 %v352
  %v498 = vpop.f32.mrf.mxu0
  %v499 = vadd.f32 0.0, %v498
  %v500 = vpop.f32.mrf.mxu0
  %v501 = vadd.f32 0.0, %v500
  %502 = vmatmul.bf16.gmra.mxu0 %v355
  %v503 = vpop.f32.mrf.mxu0
  %v504 = vadd.f32 0.0, %v503
  %v505 = vpop.f32.mrf.mxu0
  %v506 = vadd.f32 0.0, %v505
  %507 = vmatmul.bf16.gmra.mxu0 %v358
  %v508 = vpop.f32.mrf.mxu0
  %v509 = vadd.f32 0.0, %v508
  %v510 = vpop.f32.mrf.mxu0
  %v511 = vadd.f32 0.0, %v510
  %512 = vmatmul.bf16.gmra.mxu0 %v361
  %v513 = vpop.f32.mrf.mxu0
  %v514 = vadd.f32 0.0, %v513
  %v515 = vpop.f32.mrf.mxu0
  %v516 = vadd.f32 0.0, %v515
  %517 = vmatmul.bf16.gmra.mxu0 %v364
  %v518 = vpop.f32.mrf.mxu0
  %v519 = vadd.f32 0.0, %v518
  %v520 = vpop.f32.mrf.mxu0
  %v521 = vadd.f32 0.0, %v520
  %522 = vmatmul.bf16.gmra.mxu0 %v367
  %v523 = vpop.f32.mrf.mxu0
  %v524 = vadd.f32 0.0, %v523
  %v525 = vpop.f32.mrf.mxu0
  %v526 = vadd.f32 0.0, %v525
  %527 = vmatmul.bf16.gmra.mxu0 %v370
  %v528 = vpop.f32.mrf.mxu0
  %v529 = vadd.f32 0.0, %v528
  %v530 = vpop.f32.mrf.mxu0
  %v531 = vadd.f32 0.0, %v530
  %532 = vmatmul.bf16.gmra.mxu0 %v373
  %v533 = vpop.f32.mrf.mxu0
  %v534 = vadd.f32 0.0, %v533
  %v535 = vpop.f32.mrf.mxu0
  %v536 = vadd.f32 0.0, %v535
  %537 = vmatmul.bf16.gmra.mxu0 %v376
  %v538 = vpop.f32.mrf.mxu0
  %v539 = vadd.f32 0.0, %v538
  %v540 = vpop.f32.mrf.mxu0
  %v541 = vadd.f32 0.0, %v540
  %542 = vmatmul.bf16.gmra.mxu0 %v379
  %v543 = vpop.f32.mrf.mxu0
  %v544 = vadd.f32 0.0, %v543
  %v545 = vpop.f32.mrf.mxu0
  %v546 = vadd.f32 0.0, %v545
  %547 = vmatmul.bf16.gmra.mxu0 %v382
  %v548 = vpop.f32.mrf.mxu0
  %v549 = vadd.f32 0.0, %v548
  %v550 = vpop.f32.mrf.mxu0
  %v551 = vadd.f32 0.0, %v550
  %552 = vdwg.mxu0
  %v553 = vld [vmem:[%s2] sm:$0x1]
  %v554 = vadd.f32 %v394, %v396
  %v555 = vadd.f32 %v554, %v399
  %v556 = vadd.f32 %v555, %v401
  %v557 = vadd.f32 %v556, %v404
  %v558 = vadd.f32 %v557, %v406
  %v559 = vadd.f32 %v558, %v409
  %v560 = vadd.f32 %v559, %v411
  %v561 = vadd.f32 %v560, %v414
  %v562 = vadd.f32 %v561, %v416
  %v563 = vadd.f32 %v562, %v419
  %v564 = vadd.f32 %v563, %v421
  %v565 = vadd.f32 %v564, %v424
  %v566 = vadd.f32 %v565, %v426
  %v567 = vadd.f32 %v566, %v429
  %v568 = vadd.f32 %v567, %v431
  %v569 = vadd.f32 %v568, %v434
  %v570 = vadd.f32 %v569, %v436
  %v571 = vadd.f32 %v570, %v439
  %v572 = vadd.f32 %v571, %v441
  %v573 = vadd.f32 %v572, %v444
  %v574 = vadd.f32 %v573, %v446
  %v575 = vadd.f32 %v574, %v449
  %v576 = vadd.f32 %v575, %v451
  %v577 = vadd.f32 %v576, %v454
  %v578 = vadd.f32 %v577, %v456
  %v579 = vadd.f32 %v578, %v459
  %v580 = vadd.f32 %v579, %v461
  %v581 = vadd.f32 %v580, %v464
  %v582 = vadd.f32 %v581, %v466
  %v583 = vadd.f32 %v582, %v469
  %v584 = vadd.f32 %v583, %v471
  %v585 = vadd.f32 %v584, %v474
  %v586 = vadd.f32 %v585, %v476
  %v587 = vadd.f32 %v586, %v479
  %v588 = vadd.f32 %v587, %v481
  %v589 = vadd.f32 %v588, %v484
  %v590 = vadd.f32 %v589, %v486
  %v591 = vadd.f32 %v590, %v489
  %v592 = vadd.f32 %v591, %v491
  %v593 = vadd.f32 %v592, %v494
  %v594 = vadd.f32 %v593, %v496
  %v595 = vadd.f32 %v594, %v499
  %v596 = vadd.f32 %v595, %v501
  %v597 = vadd.f32 %v596, %v504
  %v598 = vadd.f32 %v597, %v506
  %v599 = vadd.f32 %v598, %v509
  %v600 = vadd.f32 %v599, %v511
  %v601 = vadd.f32 %v600, %v514
  %v602 = vadd.f32 %v601, %v516
  %v603 = vadd.f32 %v602, %v519
  %v604 = vadd.f32 %v603, %v521
  %v605 = vadd.f32 %v604, %v524
  %v606 = vadd.f32 %v605, %v526
  %v607 = vadd.f32 %v606, %v529
  %v608 = vadd.f32 %v607, %v531
  %v609 = vadd.f32 %v608, %v534
  %v610 = vadd.f32 %v609, %v536
  %v611 = vadd.f32 %v610, %v539
  %v612 = vadd.f32 %v611, %v541
  %v613 = vadd.f32 %v612, %v544
  %v614 = vadd.f32 %v613, %v546
  %v615 = vadd.f32 %v614, %v549
  %v616 = vadd.f32 %v615, %v551
  %v617 = vrot.slane %v616, 4
  %v618 = vadd.f32 %v616, %v617
  %v619 = vrot.slane %v618, 2
  %v620 = vadd.f32 %v618, %v619
  %v621 = vrot.slane %v620, 1
  %v622 = vadd.f32 %v620, %v621
  %v623 = vadd.f32 %v553, %v622
  %624 = vst [vmem:[%s2] sm:$0x1] %v623
  %v625 = vld [vmem:[%s2 + $0x1] sm:$0x1]
  %v626 = vmul.f32 %v394, %v394
  %v627 = vmul.f32 %v396, %v396
  %v628 = vmul.f32 %v399, %v399
  %v629 = vmul.f32 %v401, %v401
  %v630 = vmul.f32 %v404, %v404
  %v631 = vmul.f32 %v406, %v406
  %v632 = vmul.f32 %v409, %v409
  %v633 = vmul.f32 %v411, %v411
  %v634 = vmul.f32 %v414, %v414
  %v635 = vmul.f32 %v416, %v416
  %v636 = vmul.f32 %v419, %v419
  %v637 = vmul.f32 %v421, %v421
  %v638 = vmul.f32 %v424, %v424
  %v639 = vmul.f32 %v426, %v426
  %v640 = vmul.f32 %v429, %v429
  %v641 = vmul.f32 %v431, %v431
  %v642 = vmul.f32 %v434, %v434
  %v643 = vmul.f32 %v436, %v436
  %v644 = vmul.f32 %v439, %v439
  %v645 = vmul.f32 %v441, %v441
  %v646 = vmul.f32 %v444, %v444
  %v647 = vmul.f32 %v446, %v446
  %v648 = vmul.f32 %v449, %v449
  %v649 = vmul.f32 %v451, %v451
  %v650 = vmul.f32 %v454, %v454
  %v651 = vmul.f32 %v456, %v456
  %v652 = vmul.f32 %v459, %v459
  %v653 = vmul.f32 %v461, %v461
  %v654 = vmul.f32 %v464, %v464
  %v655 = vmul.f32 %v466, %v466
  %v656 = vmul.f32 %v469, %v469
  %v657 = vmul.f32 %v471, %v471
  %v658 = vmul.f32 %v474, %v474
  %v659 = vmul.f32 %v476, %v476
  %v660 = vmul.f32 %v479, %v479
  %v661 = vmul.f32 %v481, %v481
  %v662 = vmul.f32 %v484, %v484
  %v663 = vmul.f32 %v486, %v486
  %v664 = vmul.f32 %v489, %v489
  %v665 = vmul.f32 %v491, %v491
  %v666 = vmul.f32 %v494, %v494
  %v667 = vmul.f32 %v496, %v496
  %v668 = vmul.f32 %v499, %v499
  %v669 = vmul.f32 %v501, %v501
  %v670 = vmul.f32 %v504, %v504
  %v671 = vmul.f32 %v506, %v506
  %v672 = vmul.f32 %v509, %v509
  %v673 = vmul.f32 %v511, %v511
  %v674 = vmul.f32 %v514, %v514
  %v675 = vmul.f32 %v516, %v516
  %v676 = vmul.f32 %v519, %v519
  %v677 = vmul.f32 %v521, %v521
  %v678 = vmul.f32 %v524, %v524
  %v679 = vmul.f32 %v526, %v526
  %v680 = vmul.f32 %v529, %v529
  %v681 = vmul.f32 %v531, %v531
  %v682 = vmul.f32 %v534, %v534
  %v683 = vmul.f32 %v536, %v536
  %v684 = vmul.f32 %v539, %v539
  %v685 = vmul.f32 %v541, %v541
  %v686 = vmul.f32 %v544, %v544
  %v687 = vmul.f32 %v546, %v546
  %v688 = vmul.f32 %v549, %v549
  %v689 = vmul.f32 %v551, %v551
  %v690 = vadd.f32 %v626, %v627
  %v691 = vadd.f32 %v690, %v628
  %v692 = vadd.f32 %v691, %v629
  %v693 = vadd.f32 %v692, %v630
  %v694 = vadd.f32 %v693, %v631
  %v695 = vadd.f32 %v694, %v632
  %v696 = vadd.f32 %v695, %v633
  %v697 = vadd.f32 %v696, %v634
  %v698 = vadd.f32 %v697, %v635
  %v699 = vadd.f32 %v698, %v636
  %v700 = vadd.f32 %v699, %v637
  %v701 = vadd.f32 %v700, %v638
  %v702 = vadd.f32 %v701, %v639
  %v703 = vadd.f32 %v702, %v640
  %v704 = vadd.f32 %v703, %v641
  %v705 = vadd.f32 %v704, %v642
  %v706 = vadd.f32 %v705, %v643
  %v707 = vadd.f32 %v706, %v644
  %v708 = vadd.f32 %v707, %v645
  %v709 = vadd.f32 %v708, %v646
  %v710 = vadd.f32 %v709, %v647
  %v711 = vadd.f32 %v710, %v648
  %v712 = vadd.f32 %v711, %v649
  %v713 = vadd.f32 %v712, %v650
  %v714 = vadd.f32 %v713, %v651
  %v715 = vadd.f32 %v714, %v652
  %v716 = vadd.f32 %v715, %v653
  %v717 = vadd.f32 %v716, %v654
  %v718 = vadd.f32 %v717, %v655
  %v719 = vadd.f32 %v718, %v656
  %v720 = vadd.f32 %v719, %v657
  %v721 = vadd.f32 %v720, %v658
  %v722 = vadd.f32 %v721, %v659
  %v723 = vadd.f32 %v722, %v660
  %v724 = vadd.f32 %v723, %v661
  %v725 = vadd.f32 %v724, %v662
  %v726 = vadd.f32 %v725, %v663
  %v727 = vadd.f32 %v726, %v664
  %v728 = vadd.f32 %v727, %v665
  %v729 = vadd.f32 %v728, %v666
  %v730 = vadd.f32 %v729, %v667
  %v731 = vadd.f32 %v730, %v668
  %v732 = vadd.f32 %v731, %v669
  %v733 = vadd.f32 %v732, %v670
  %v734 = vadd.f32 %v733, %v671
  %v735 = vadd.f32 %v734, %v672
  %v736 = vadd.f32 %v735, %v673
  %v737 = vadd.f32 %v736, %v674
  %v738 = vadd.f32 %v737, %v675
  %v739 = vadd.f32 %v738, %v676
  %v740 = vadd.f32 %v739, %v677
  %v741 = vadd.f32 %v740, %v678
  %v742 = vadd.f32 %v741, %v679
  %v743 = vadd.f32 %v742, %v680
  %v744 = vadd.f32 %v743, %v681
  %v745 = vadd.f32 %v744, %v682
  %v746 = vadd.f32 %v745, %v683
  %v747 = vadd.f32 %v746, %v684
  %v748 = vadd.f32 %v747, %v685
  %v749 = vadd.f32 %v748, %v686
  %v750 = vadd.f32 %v749, %v687
  %v751 = vadd.f32 %v750, %v688
  %v752 = vadd.f32 %v751, %v689
  %v753 = vrot.slane %v752, 4
  %v754 = vadd.f32 %v752, %v753
  %v755 = vrot.slane %v754, 2
  %v756 = vadd.f32 %v754, %v755
  %v757 = vrot.slane %v756, 1
  %v758 = vadd.f32 %v756, %v757
  %v759 = vadd.f32 %v625, %v758
  %760 = vst [vmem:[%s2 + $0x1] sm:$0x1] %v759
  // Predicated region
  $region14: #{conv_bn_relu.2} parent=0 // pred_check
    _
  $region15: #{conv_bn_relu.2} parent=0 // pred_check_branch
    %762 = sbr.rel (0) target = $region17
  $region16: #{conv_bn_relu.2} parent=0 // pred_region
    _
  $region17: #{conv_bn_relu.2} parent=0 // pred_fallthru
    _
  // Predicated region
  $region18: #{conv_bn_relu.2} parent=0 // pred_check
    _
  $region19: #{conv_bn_relu.2} parent=0 // pred_check_branch
    %764 = sbr.rel (0) target = $region21
  $region20: #{conv_bn_relu.2} parent=0 // pred_region
    _
  $region21: #{conv_bn_relu.2} parent=0 // pred_fallthru
    _

// kernel: conv_bn_relu.3
$region0: #{conv_bn_relu.3}
  #allocation0 [shape = 'u32[]', space=smem, size = 0x4, offset = 0x4, fixed_abs, tag = 'smem constant byte address 0x4 - core index']
  #allocation1 [shape = 'u32[72,128]{1,0:T(1,128)}', space=vmem, size = 0x9000, scoped, tag = 'internal scratch']
  %s0 = inlined_call_operand.vmem [shape: bf16[512,48], index: 0, kind: input, shape index: {}]
  %s1 = inlined_call_operand.vmem [shape: bf16[48,128], index: 1, kind: input, shape index: {}]
  %s2 = inlined_call_operand.vmem [shape: f32[1,128], index: 2, kind: input, shape index: {}]
  %s3 = inlined_call_operand.vmem [shape: f32[1,128], index: 3, kind: input, shape index: {}]
  %s4 = inlined_call_operand.vmem [shape: f32[512,128], index: 4, kind: output, shape index: {}]
  %s5 = sld [smem:[#allocation0]]
  $region26: #{conv_bn_relu.3} parent=0
    _
  %s7 = ssub.s32 1, %s5
  %s8 = scalar_select 0, %s7, %s5
  // Predicated region
  $region2: #{conv_bn_relu.3} parent=0 // pred_check
    _
  $region3: #{conv_bn_relu.3} parent=0 // pred_check_branch
    %10 = sbr.rel (0) target = $region5
  $region4: #{conv_bn_relu.3} parent=0 // pred_region
    _
  $region5: #{conv_bn_relu.3} parent=0 // pred_fallthru
    _
  // Predicated region
  $region6: #{conv_bn_relu.3} parent=0 // pred_check
    _
  $region7: #{conv_bn_relu.3} parent=0 // pred_check_branch
    %12 = sbr.rel (0) target = $region9
  $region8: #{conv_bn_relu.3} parent=0 // pred_region
    _
  $region9: #{conv_bn_relu.3} parent=0 // pred_fallthru
    _
  // Predicated region
  $region10: #{conv_bn_relu.3} parent=0 // pred_check
    _
  $region11: #{conv_bn_relu.3} parent=0 // pred_check_branch
    %14 = sbr.rel (0) target = $region13
  $region12: #{conv_bn_relu.3} parent=0 // pred_region
    _
  $region13: #{conv_bn_relu.3} parent=0 // pred_fallthru
    _
  // Predicated region
  $region14: #{conv_bn_relu.3} parent=0 // pred_check
    _
  $region15: #{conv_bn_relu.3} parent=0 // pred_check_branch
    %16 = sbr.rel (0) target = $region17
  $region16: #{conv_bn_relu.3} parent=0 // pred_region
    _
  $region17: #{conv_bn_relu.3} parent=0 // pred_fallthru
    _
  %v18 = vld [vmem:[%s0] sm:$0xf]
  %v19 = vld [vmem:[%s0 + $0x4] sm:$0xf]
  %v20 = vld [vmem:[%s0 + $0x8] sm:$0xf]
  %v21 = vld [vmem:[%s0 + $0xc] sm:$0xf]
  %v22 = vld [vmem:[%s0 + $0x10] sm:$0xf]
  %v23 = vld [vmem:[%s0 + $0x14] sm:$0xf]
  %v24 = vld [vmem:[%s0 + $0x18] sm:$0xf]
  %v25 = vld [vmem:[%s0 + $0x1c] sm:$0xf]
  %v26 = vld [vmem:[%s0 + $0x20] sm:$0xf]
  %v27 = vld [vmem:[%s0 + $0x24] sm:$0xf]
  %v28 = vld [vmem:[%s0 + $0x28] sm:$0xf]
  %v29 = vld [vmem:[%s0 + $0x2c] sm:$0xf]
  %v30 = vld [vmem:[%s0 + $0x30] sm:$0xf]
  %v31 = vld [vmem:[%s0 + $0x34] sm:$0xf]
  %v32 = vld [vmem:[%s0 + $0x38] sm:$0xf]
  %v33 = vld [vmem:[%s0 + $0x3c] sm:$0xf]
  %v34 = vld [vmem:[%s0 + $0x40] sm:$0xf]
  %v35 = vld [vmem:[%s0 + $0x44] sm:$0xf]
  %v36 = vld [vmem:[%s0 + $0x48] sm:$0xf]
  %v37 = vld [vmem:[%s0 + $0x4c] sm:$0xf]
  %v38 = vld [vmem:[%s0 + $0x50] sm:$0xf]
  %v39 = vld [vmem:[%s0 + $0x54] sm:$0xf]
  %v40 = vld [vmem:[%s0 + $0x58] sm:$0xf]
  %v41 = vld [vmem:[%s0 + $0x5c] sm:$0xf]
  %v42 = vld [vmem:[%s0 + $0x60] sm:$0xf]
  %v43 = vld [vmem:[%s0 + $0x64] sm:$0xf]
  %v44 = vld [vmem:[%s0 + $0x68] sm:$0xf]
  %v45 = vld [vmem:[%s0 + $0x6c] sm:$0xf]
  %v46 = vld [vmem:[%s0 + $0x70] sm:$0xf]
  %v47 = vld [vmem:[%s0 + $0x74] sm:$0xf]
  %v48 = vld [vmem:[%s0 + $0x78] sm:$0xf]
  %v49 = vld [vmem:[%s0 + $0x7c] sm:$0xf]
  %v50 = vld [vmem:[%s0 + $0x80] sm:$0xf]
  %v51 = vld [vmem:[%s0 + $0x84] sm:$0xf]
  %v52 = vld [vmem:[%s0 + $0x88] sm:$0xf]
  %v53 = vld [vmem:[%s0 + $0x8c] sm:$0xf]
  %v54 = vld [vmem:[%s0 + $0x90] sm:$0xf]
  %v55 = vld [vmem:[%s0 + $0x94] sm:$0xf]
  %v56 = vld [vmem:[%s0 + $0x98] sm:$0xf]
  %v57 = vld [vmem:[%s0 + $0x9c] sm:$0xf]
  %v58 = vld [vmem:[%s0 + $0xa0] sm:$0xf]
  %v59 = vld [vmem:[%s0 + $0xa4] sm:$0xf]
  %v60 = vld [vmem:[%s0 + $0xa8] sm:$0xf]
  %v61 = vld [vmem:[%s0 + $0xac] sm:$0xf]
  %v62 = vld [vmem:[%s0 + $0xb0] sm:$0xf]
  %v63 = vld [vmem:[%s0 + $0xb4] sm:$0xf]
  %v64 = vld [vmem:[%s0 + $0xb8] sm:$0xf]
  %v65 = vld [vmem:[%s0 + $0xbc] sm:$0xf]
  %v66 = vld [vmem:[%s0 + $0xc0] sm:$0xf]
  %v67 = vld [vmem:[%s0 + $0xc4] sm:$0xf]
  %v68 = vld [vmem:[%s0 + $0xc8] sm:$0xf]
  %v69 = vld [vmem:[%s0 + $0xcc] sm:$0xf]
  %v70 = vld [vmem:[%s0 + $0xd0] sm:$0xf]
  %v71 = vld [vmem:[%s0 + $0xd4] sm:$0xf]
  %v72 = vld [vmem:[%s0 + $0xd8] sm:$0xf]
  %v73 = vld [vmem:[%s0 + $0xdc] sm:$0xf]
  %v74 = vld [vmem:[%s0 + $0xe0] sm:$0xf]
  %v75 = vld [vmem:[%s0 + $0xe4] sm:$0xf]
  %v76 = vld [vmem:[%s0 + $0xe8] sm:$0xf]
  %v77 = vld [vmem:[%s0 + $0xec] sm:$0xf]
  %v78 = vld [vmem:[%s0 + $0xf0] sm:$0xf]
  %v79 = vld [vmem:[%s0 + $0xf4] sm:$0xf]
  %v80 = vld [vmem:[%s0 + $0xf8] sm:$0xf]
  %v81 = vld [vmem:[%s0 + $0xfc] sm:$0xf]
  %v82 = vld [vmem:[%s1] sm:$0xf]
  %v83 = vld [vmem:[%s1 + $0x4] sm:$0xf]
  %v84 = vld [vmem:[%s1 + $0x8] sm:$0xf]
  %v85 = vld [vmem:[%s1 + $0xc] sm:$0xf]
  %v86 = vld [vmem:[%s1 + $0x10] sm:$0xf]
  %v87 = vld [vmem:[%s1 + $0x14] sm:$0xf]
  %v152 = vunpack.c.l.b16 %v18
  %v153 = vunpack.c.l.b16 %v19
  %v154 = vunpack.c.l.b16 %v20
  %v155 = vunpack.c.l.b16 %v21
  %v156 = vunpack.c.l.b16 %v22
  %v157 = vunpack.c.l.b16 %v23
  %v158 = vunpack.c.l.b16 %v24
  %v159 = vunpack.c.l.b16 %v25
  %v160 = vunpack.c.l.b16 %v26
  %v161 = vunpack.c.l.b16 %v27
  %v162 = vunpack.c.l.b16 %v28
  %v163 = vunpack.c.l.b16 %v29
  %v164 = vunpack.c.l.b16 %v30
  %v165 = vunpack.c.l.b16 %v31
  %v166 = vunpack.c.l.b16 %v32
  %v167 = vunpack.c.l.b16 %v33
  %v168 = vunpack.c.l.b16 %v34
  %v169 = vunpack.c.l.b16 %v35
  %v170 = vunpack.c.l.b16 %v36
  %v171 = vunpack.c.l.b16 %v37
  %v172 = vunpack.c.l.b16 %v38
  %v173 = vunpack.c.l.b16 %v39
  %v174 = vunpack.c.l.b16 %v40
  %v175 = vunpack.c.l.b16 %v41
  %v176 = vunpack.c.l.b16 %v42
  %v177 = vunpack.c.l.b16 %v43
  %v178 = vunpack.c.l.b16 %v44
  %v179 = vunpack.c.l.b16 %v45
  %v180 = vunpack.c.l.b16 %v46
  %v181 = vunpack.c.l.b16 %v47
  %v182 = vunpack.c.l.b16 %v48
  %v183 = vunpack.c.l.b16 %v49
  %v184 = vunpack.c.l.b16 %v50
  %v185 = vunpack.c.l.b16 %v51
  %v186 = vunpack.c.l.b16 %v52
  %v187 = vunpack.c.l.b16 %v53
  %v188 = vunpack.c.l.b16 %v54
  %v189 = vunpack.c.l.b16 %v55
  %v190 = vunpack.c.l.b16 %v56
  %v191 = vunpack.c.l.b16 %v57
  %v192 = vunpack.c.l.b16 %v58
  %v193 = vunpack.c.l.b16 %v59
  %v194 = vunpack.c.l.b16 %v60
  %v195 = vunpack.c.l.b16 %v61
  %v196 = vunpack.c.l.b16 %v62
  %v197 = vunpack.c.l.b16 %v63
  %v198 = vunpack.c.l.b16 %v64
  %v199 = vunpack.c.l.b16 %v65
  %v200 = vunpack.c.l.b16 %v66
  %v201 = vunpack.c.l.b16 %v67
  %v202 = vunpack.c.l.b16 %v68
  %v203 = vunpack.c.l.b16 %v69
  %v204 = vunpack.c.l.b16 %v70
  %v205 = vunpack.c.l.b16 %v71
  %v206 = vunpack.c.l.b16 %v72
  %v207 = vunpack.c.l.b16 %v73
  %v208 = vunpack.c.l.b16 %v74
  %v209 = vunpack.c.l.b16 %v75
  %v210 = vunpack.c.l.b16 %v76
  %v211 = vunpack.c.l.b16 %v77
  %v212 = vunpack.c.l.b16 %v78
  %v213 = vunpack.c.l.b16 %v79
  %v214 = vunpack.c.l.b16 %v80
  %v215 = vunpack.c.l.b16 %v81
  %v216 = vpack.c.b16 %v153, %v152
  %v217 = vpack.c.b16 %v155, %v154
  %v218 = vpack.c.b16 %v157, %v156
  %v219 = vpack.c.b16 %v159, %v158
  %v220 = vpack.c.b16 %v161, %v160
  %v221 = vpack.c.b16 %v163, %v162
  %v222 = vpack.c.b16 %v165, %v164
  %v223 = vpack.c.b16 %v167, %v166
  %v224 = vpack.c.b16 %v169, %v168
  %v225 = vpack.c.b16 %v171, %v170
  %v226 = vpack.c.b16 %v173, %v172
  %v227 = vpack.c.b16 %v175, %v174
  %v228 = vpack.c.b16 %v177, %v176
  %v229 = vpack.c.b16 %v179, %v178
  %v230 = vpack.c.b16 %v181, %v180
  %v231 = vpack.c.b16 %v183, %v182
  %v232 = vpack.c.b16 %v185, %v184
  %v233 = vpack.c.b16 %v187, %v186
  %v234 = vpack.c.b16 %v189, %v188
  %v235 = vpack.c.b16 %v191, %v190
  %v236 = vpack.c.b16 %v193, %v192
  %v237 = vpack.c.b16 %v195, %v194
  %v238 = vpack.c.b16 %v197, %v196
  %v239 = vpack.c.b16 %v199, %v198
  %v240 = vpack.c.b16 %v201, %v200
  %v241 = vpack.c.b16 %v203, %v202
  %v242 = vpack.c.b16 %v205, %v204
  %v243 = vpack.c.b16 %v207, %v206
  %v244 = vpack.c.b16 %v209, %v208
  %v245 = vpack.c.b16 %v211, %v210
  %v246 = vpack.c.b16 %v213, %v212
  %v247 = vpack.c.b16 %v215, %v214
  %v254 = vunpack.c.l.b16 %v82
  %v255 = vunpack.c.l.b16 %v83
  %v256 = vunpack.c.l.b16 %v84
  %v257 = vunpack.c.l.b16 %v85
  %v258 = vunpack.c.l.b16 %v86
  %v259 = vunpack.c.l.b16 %v87
  %v260 = vpack.c.b16 %v255, %v254
  %v261 = vpack.c.b16 %v257, %v256
  %v262 = vpack.c.b16 %v259, %v258
  %vm266 = vcmask 392192
  %v268 = vsel %vm266, %v216, 0
  %v271 = vsel %vm266, %v217, 0
  %v274 = vsel %vm266, %v218, 0
  %v277 = vsel %vm266, %v219, 0
  %v280 = vsel %vm266, %v220, 0
  %v283 = vsel %vm266, %v221, 0
  %v286 = vsel %vm266, %v222, 0
  %v289 = vsel %vm266, %v223, 0
  %v292 = vsel %vm266, %v224, 0
  %v295 = vsel %vm266, %v225, 0
  %v298 = vsel %vm266, %v226, 0
  %v301 = vsel %vm266, %v227, 0
  %v304 = vsel %vm266, %v228, 0
  %v307 = vsel %vm266, %v229, 0
  %v310 = vsel %vm266, %v230, 0
  %v313 = vsel %vm266, %v231, 0
  %v316 = vsel %vm266, %v232, 0
  %v319 = vsel %vm266, %v233, 0
  %v322 = vsel %vm266, %v234, 0
  %v325 = vsel %vm266, %v235, 0
  %v328 = vsel %vm266, %v236, 0
  %v331 = vsel %vm266, %v237, 0
  %v334 = vsel %vm266, %v238, 0
  %v337 = vsel %vm266, %v239, 0
  %v340 = vsel %vm266, %v240, 0
  %v343 = vsel %vm266, %v241, 0
  %v346 = vsel %vm266, %v242, 0
  %v349 = vsel %vm266, %v243, 0
  %v352 = vsel %vm266, %v244, 0
  %v355 = vsel %vm266, %v245, 0
  %v358 = vsel %vm266, %v246, 0
  %v361 = vsel %vm266, %v247, 0
  %363 = vmatpush.bf16.msra.mxu0 0
  %364 = vmatpush.bf16.msra.mxu0 0
  %365 = vmatpush.bf16.msra.mxu0 0
  %366 = vmatpush.bf16.msra.mxu0 0
  %367 = vmatpush.bf16.msra.mxu0 0
  %368 = vmatpush.bf16.msra.mxu0 %v262
  %369 = vmatpush.bf16.msra.mxu0 %v261
  %370 = vmatpush.bf16.msra.mxu0 %v260
  %371 = vmatmul.bf16.gmra.mxu0 %v268
  %v372 = vpop.f32.mrf.mxu0
  %v373 = vadd.f32 0.0, %v372
  %v374 = vpop.f32.mrf.mxu0
  %v375 = vadd.f32 0.0, %v374
  %376 = vmatmul.bf16.gmra.mxu0 %v271
  %v377 = vpop.f32.mrf.mxu0
  %v378 = vadd.f32 0.0, %v377
  %v379 = vpop.f32.mrf.mxu0
  %v380 = vadd.f32 0.0, %v379
  %381 = vmatmul.bf16.gmra.mxu0 %v274
  %v382 = vpop.f32.mrf.mxu0
  %v383 = vadd.f32 0.0, %v382
  %v384 = vpop.f32.mrf.mxu0
  %v385 = vadd.f32 0.0, %v384
  %386 = vmatmul.bf16.gmra.mxu0 %v277
  %v387 = vpop.f32.mrf.mxu0
  %v388 = vadd.f32 0.0, %v387
  %v389 = vpop.f32.mrf.mxu0
  %v390 = vadd.f32 0.0, %v389
  %391 = vmatmul.bf16.gmra.mxu0 %v280
  %v392 = vpop.f32.mrf.mxu0
  %v393 = vadd.f32 0.0, %v392
  %v394 = vpop.f32.mrf.mxu0
  %v395 = vadd.f32 0.0, %v394
  %396 = vmatmul.bf16.gmra.mxu0 %v283
  %v397 = vpop.f32.mrf.mxu0
  %v398 = vadd.f32 0.0, %v397
  %v399 = vpop.f32.mrf.mxu0
  %v400 = vadd.f32 0.0, %v399
  %401 = vmatmul.bf16.gmra.mxu0 %v286
  %v402 = vpop.f32.mrf.mxu0
  %v403 = vadd.f32 0.0, %v402
  %v404 = vpop.f32.mrf.mxu0
  %v405 = vadd.f32 0.0, %v404
  %406 = vmatmul.bf16.gmra.mxu0 %v289
  %v407 = vpop.f32.mrf.mxu0
  %v408 = vadd.f32 0.0, %v407
  %v409 = vpop.f32.mrf.mxu0
  %v410 = vadd.f32 0.0, %v409
  %411 = vmatmul.bf16.gmra.mxu0 %v292
  %v412 = vpop.f32.mrf.mxu0
  %v413 = vadd.f32 0.0, %v412
  %v414 = vpop.f32.mrf.mxu0
  %v415 = vadd.f32 0.0, %v414
  %416 = vmatmul.bf16.gmra.mxu0 %v295
  %v417 = vpop.f32.mrf.mxu0
  %v418 = vadd.f32 0.0, %v417
  %v419 = vpop.f32.mrf.mxu0
  %v420 = vadd.f32 0.0, %v419
  %421 = vmatmul.bf16.gmra.mxu0 %v298
  %v422 = vpop.f32.mrf.mxu0
  %v423 = vadd.f32 0.0, %v422
  %v424 = vpop.f32.mrf.mxu0
  %v425 = vadd.f32 0.0, %v424
  %426 = vmatmul.bf16.gmra.mxu0 %v301
  %v427 = vpop.f32.mrf.mxu0
  %v428 = vadd.f32 0.0, %v427
  %v429 = vpop.f32.mrf.mxu0
  %v430 = vadd.f32 0.0, %v429
  %431 = vmatmul.bf16.gmra.mxu0 %v304
  %v432 = vpop.f32.mrf.mxu0
  %v433 = vadd.f32 0.0, %v432
  %v434 = vpop.f32.mrf.mxu0
  %v435 = vadd.f32 0.0, %v434
  %436 = vmatmul.bf16.gmra.mxu0 %v307
  %v437 = vpop.f32.mrf.mxu0
  %v438 = vadd.f32 0.0, %v437
  %v439 = vpop.f32.mrf.mxu0
  %v440 = vadd.f32 0.0, %v439
  %441 = vmatmul.bf16.gmra.mxu0 %v310
  %v442 = vpop.f32.mrf.mxu0
  %v443 = vadd.f32 0.0, %v442
  %v444 = vpop.f32.mrf.mxu0
  %v445 = vadd.f32 0.0, %v444
  %446 = vmatmul.bf16.gmra.mxu0 %v313
  %v447 = vpop.f32.mrf.mxu0
  %v448 = vadd.f32 0.0, %v447
  %v449 = vpop.f32.mrf.mxu0
  %v450 = vadd.f32 0.0, %v449
  %451 = vmatmul.bf16.gmra.mxu0 %v316
  %v452 = vpop.f32.mrf.mxu0
  %v453 = vadd.f32 0.0, %v452
  %v454 = vpop.f32.mrf.mxu0
  %v455 = vadd.f32 0.0, %v454
  %456 = vmatmul.bf16.gmra.mxu0 %v319
  %v457 = vpop.f32.mrf.mxu0
  %v458 = vadd.f32 0.0, %v457
  %v459 = vpop.f32.mrf.mxu0
  %v460 = vadd.f32 0.0, %v459
  %461 = vmatmul.bf16.gmra.mxu0 %v322
  %v462 = vpop.f32.mrf.mxu0
  %v463 = vadd.f32 0.0, %v462
  %v464 = vpop.f32.mrf.mxu0
  %v465 = vadd.f32 0.0, %v464
  %466 = vmatmul.bf16.gmra.mxu0 %v325
  %v467 = vpop.f32.mrf.mxu0
  %v468 = vadd.f32 0.0, %v467
  %v469 = vpop.f32.mrf.mxu0
  %v470 = vadd.f32 0.0, %v469
  %471 = vmatmul.bf16.gmra.mxu0 %v328
  %v472 = vpop.f32.mrf.mxu0
  %v473 = vadd.f32 0.0, %v472
  %v474 = vpop.f32.mrf.mxu0
  %v475 = vadd.f32 0.0, %v474
  %476 = vmatmul.bf16.gmra.mxu0 %v331
  %v477 = vpop.f32.mrf.mxu0
  %v478 = vadd.f32 0.0, %v477
  %v479 = vpop.f32.mrf.mxu0
  %v480 = vadd.f32 0.0, %v479
  %481 = vmatmul.bf16.gmra.mxu0 %v334
  %v482 = vpop.f32.mrf.mxu0
  %v483 = vadd.f32 0.0, %v482
  %v484 = vpop.f32.mrf.mxu0
  %v485 = vadd.f32 0.0, %v484
  %486 = vmatmul.bf16.gmra.mxu0 %v337
  %v487 = vpop.f32.mrf.mxu0
  %v488 = vadd.f32 0.0, %v487
  %v489 = vpop.f32.mrf.mxu0
  %v490 = vadd.f32 0.0, %v489
  %491 = vmatmul.bf16.gmra.mxu0 %v340
  %v492 = vpop.f32.mrf.mxu0
  %v493 = vadd.f32 0.0, %v492
  %v494 = vpop.f32.mrf.mxu0
  %v495 = vadd.f32 0.0, %v494
  %496 = vmatmul.bf16.gmra.mxu0 %v343
  %v497 = vpop.f32.mrf.mxu0
  %v498 = vadd.f32 0.0, %v497
  %v499 = vpop.f32.mrf.mxu0
  %v500 = vadd.f32 0.0, %v499
  %501 = vmatmul.bf16.gmra.mxu0 %v346
  %v502 = vpop.f32.mrf.mxu0
  %v503 = vadd.f32 0.0, %v502
  %v504 = vpop.f32.mrf.mxu0
  %v505 = vadd.f32 0.0, %v504
  %506 = vmatmul.bf16.gmra.mxu0 %v349
  %v507 = vpop.f32.mrf.mxu0
  %v508 = vadd.f32 0.0, %v507
  %v509 = vpop.f32.mrf.mxu0
  %v510 = vadd.f32 0.0, %v509
  %511 = vmatmul.bf16.gmra.mxu0 %v352
  %v512 = vpop.f32.mrf.mxu0
  %v513 = vadd.f32 0.0, %v512
  %v514 = vpop.f32.mrf.mxu0
  %v515 = vadd.f32 0.0, %v514
  %516 = vmatmul.bf16.gmra.mxu0 %v355
  %v517 = vpop.f32.mrf.mxu0
  %v518 = vadd.f32 0.0, %v517
  %v519 = vpop.f32.mrf.mxu0
  %v520 = vadd.f32 0.0, %v519
  %521 = vmatmul.bf16.gmra.mxu0 %v358
  %v522 = vpop.f32.mrf.mxu0
  %v523 = vadd.f32 0.0, %v522
  %v524 = vpop.f32.mrf.mxu0
  %v525 = vadd.f32 0.0, %v524
  %526 = vmatmul.bf16.gmra.mxu0 %v361
  %v527 = vpop.f32.mrf.mxu0
  %v528 = vadd.f32 0.0, %v527
  %v529 = vpop.f32.mrf.mxu0
  %v530 = vadd.f32 0.0, %v529
  %531 = vdwg.mxu0
  %v532 = vld [vmem:[%s2] sm:$0x1]
  %v534 = vperm.slane %v532, 0
  %v536 = vmul.f32 %v373, %v534
  %v537 = vmul.f32 %v375, %v534
  %v538 = vmul.f32 %v378, %v534
  %v539 = vmul.f32 %v380, %v534
  %v540 = vmul.f32 %v383, %v534
  %v541 = vmul.f32 %v385, %v534
  %v542 = vmul.f32 %v388, %v534
  %v543 = vmul.f32 %v390, %v534
  %v544 = vmul.f32 %v393, %v534
  %v545 = vmul.f32 %v395, %v534
  %v546 = vmul.f32 %v398, %v534
  %v547 = vmul.f32 %v400, %v534
  %v548 = vmul.f32 %v403, %v534
  %v549 = vmul.f32 %v405, %v534
  %v550 = vmul.f32 %v408, %v534
  %v551 = vmul.f32 %v410, %v534
  %v552 = vmul.f32 %v413, %v534
  %v553 = vmul.f32 %v415, %v534
  %v554 = vmul.f32 %v418, %v534
  %v555 = vmul.f32 %v420, %v534
  %v556 = vmul.f32 %v423, %v534
  %v557 = vmul.f32 %v425, %v534
  %v558 = vmul.f32 %v428, %v534
  %v559 = vmul.f32 %v430, %v534
  %v560 = vmul.f32 %v433, %v534
  %v561 = vmul.f32 %v435, %v534
  %v562 = vmul.f32 %v438, %v534
  %v563 = vmul.f32 %v440, %v534
  %v564 = vmul.f32 %v443, %v534
  %v565 = vmul.f32 %v445, %v534
  %v566 = vmul.f32 %v448, %v534
  %v567 = vmul.f32 %v450, %v534
  %v568 = vmul.f32 %v453, %v534
  %v569 = vmul.f32 %v455, %v534
  %v570 = vmul.f32 %v458, %v534
  %v571 = vmul.f32 %v460, %v534
  %v572 = vmul.f32 %v463, %v534
  %v573 = vmul.f32 %v465, %v534
  %v574 = vmul.f32 %v468, %v534
  %v575 = vmul.f32 %v470, %v534
  %v576 = vmul.f32 %v473, %v534
  %v577 = vmul.f32 %v475, %v534
  %v578 = vmul.f32 %v478, %v534
  %v579 = vmul.f32 %v480, %v534
  %v580 = vmul.f32 %v483, %v534
  %v581 = vmul.f32 %v485, %v534
  %v582 = vmul.f32 %v488, %v534
  %v583 = vmul.f32 %v490, %v534
  %v584 = vmul.f32 %v493, %v534
  %v585 = vmul.f32 %v495, %v534
  %v586 = vmul.f32 %v498, %v534
  %v587 = vmul.f32 %v500, %v534
  %v588 = vmul.f32 %v503, %v534
  %v589 = vmul.f32 %v505, %v534
  %v590 = vmul.f32 %v508, %v534
  %v591 = vmul.f32 %v510, %v534
  %v592 = vmul.f32 %v513, %v534
  %v593 = vmul.f32 %v515, %v534
  %v594 = vmul.f32 %v518, %v534
  %v595 = vmul.f32 %v520, %v534
  %v596 = vmul.f32 %v523, %v534
  %v597 = vmul.f32 %v525, %v534
  %v598 = vmul.f32 %v528, %v534
  %v599 = vmul.f32 %v530, %v534
  %v600 = vld [vmem:[%s3] sm:$0x1]
  %v602 = vperm.slane %v600, 0
  %v604 = vadd.f32 %v536, %v602
  %v605 = vadd.f32 %v537, %v602
  %v606 = vadd.f32 %v538, %v602
  %v607 = vadd.f32 %v539, %v602
  %v608 = vadd.f32 %v540, %v602
  %v609 = vadd.f32 %v541, %v602
  %v610 = vadd.f32 %v542, %v602
  %v611 = vadd.f32 %v543, %v602
  %v612 = vadd.f32 %v544, %v602
  %v613 = vadd.f32 %v545, %v602
  %v614 = vadd.f32 %v546, %v602
  %v615 = vadd.f32 %v547, %v602
  %v616 = vadd.f32 %v548, %v602
  %v617 = vadd.f32 %v549, %v602
  %v618 = vadd.f32 %v550, %v602
  %v619 = vadd.f32 %v551, %v602
  %v620 = vadd.f32 %v552, %v602
  %v621 = vadd.f32 %v553, %v602
  %v622 = vadd.f32 %v554, %v602
  %v623 = vadd.f32 %v555, %v602
  %v624 = vadd.f32 %v556, %v602
  %v625 = vadd.f32 %v557, %v602
  %v626 = vadd.f32 %v558, %v602
  %v627 = vadd.f32 %v559, %v602
  %v628 = vadd.f32 %v560, %v602
  %v629 = vadd.f32 %v561, %v602
  %v630 = vadd.f32 %v562, %v602
  %v631 = vadd.f32 %v563, %v602
  %v632 = vadd.f32 %v564, %v602
  %v633 = vadd.f32 %v565, %v602
  %v634 = vadd.f32 %v566, %v602
  %v635 = vadd.f32 %v567, %v602
  %v636 = vadd.f32 %v568, %v602
  %v637 = vadd.f32 %v569, %v602
  %v638 = vadd.f32 %v570, %v602
  %v639 = vadd.f32 %v571, %v602
  %v640 = vadd.f32 %v572, %v602
  %v641 = vadd.f32 %v573, %v602
  %v642 = vadd.f32 %v574, %v602
  %v643 = vadd.f32 %v575, %v602
  %v644 = vadd.f32 %v576, %v602
  %v645 = vadd.f32 %v577, %v602
  %v646 = vadd.f32 %v578, %v602
  %v647 = vadd.f32 %v579, %v602
  %v648 = vadd.f32 %v580, %v602
  %v649 = vadd.f32 %v581, %v602
  %v650 = vadd.f32 %v582, %v602
  %v651 = vadd.f32 %v583, %v602
  %v652 = vadd.f32 %v584, %v602
  %v653 = vadd.f32 %v585, %v602
  %v654 = vadd.f32 %v586, %v602
  %v655 = vadd.f32 %v587, %v602
  %v656 = vadd.f32 %v588, %v602
  %v657 = vadd.f32 %v589, %v602
  %v658 = vadd.f32 %v590, %v602
  %v659 = vadd.f32 %v591, %v602
  %v660 = vadd.f32 %v592, %v602
  %v661 = vadd.f32 %v593, %v602
  %v662 = vadd.f32 %v594, %v602
  %v663 = vadd.f32 %v595, %v602
  %v664 = vadd.f32 %v596, %v602
  %v665 = vadd.f32 %v597, %v602
  %v666 = vadd.f32 %v598, %v602
  %v667 = vadd.f32 %v599, %v602
  %v668 = vmax.f32 %v604, 0.0
  %v669 = vmax.f32 %v605, 0.0
  %v670 = vmax.f32 %v606, 0.0
  %v671 = vmax.f32 %v607, 0.0
  %v672 = vmax.f32 %v608, 0.0
  %v673 = vmax.f32 %v609, 0.0
  %v674 = vmax.f32 %v610, 0.0
  %v675 = vmax.f32 %v611, 0.0
  %v676 = vmax.f32 %v612, 0.0
  %v677 = vmax.f32 %v613, 0.0
  %v678 = vmax.f32 %v614, 0.0
  %v679 = vmax.f32 %v615, 0.0
  %v680 = vmax.f32 %v616, 0.0
  %v681 = vmax.f32 %v617, 0.0
  %v682 = vmax.f32 %v618, 0.0
  %v683 = vmax.f32 %v619, 0.0
  %v684 = vmax.f32 %v620, 0.0
  %v685 = vmax.f32 %v621, 0.0
  %v686 = vmax.f32 %v622, 0.0
  %v687 = vmax.f32 %v623, 0.0
  %v688 = vmax.f32 %v624, 0.0
  %v689 = vmax.f32 %v625, 0.0
  %v690 = vmax.f32 %v626, 0.0
  %v691 = vmax.f32 %v627, 0.0
  %v692 = vmax.f32 %v628, 0.0
  %v693 = vmax.f32 %v629, 0.0
  %v694 = vmax.f32 %v630, 0.0
  %v695 = vmax.f32 %v631, 0.0
  %v696 = vmax.f32 %v632, 0.0
  %v697 = vmax.f32 %v633, 0.0
  %v698 = vmax.f32 %v634, 0.0
  %v699 = vmax.f32 %v635, 0.0
  %v700 = vmax.f32 %v636, 0.0
  %v701 = vmax.f32 %v637, 0.0
  %v702 = vmax.f32 %v638, 0.0
  %v703 = vmax.f32 %v639, 0.0
  %v704 = vmax.f32 %v640, 0.0
  %v705 = vmax.f32 %v641, 0.0
  %v706 = vmax.f32 %v642, 0.0
  %v707 = vmax.f32 %v643, 0.0
  %v708 = vmax.f32 %v644, 0.0
  %v709 = vmax.f32 %v645, 0.0
  %v710 = vmax.f32 %v646, 0.0
  %v711 = vmax.f32 %v647, 0.0
  %v712 = vmax.f32 %v648, 0.0
  %v713 = vmax.f32 %v649, 0.0
  %v714 = vmax.f32 %v650, 0.0
  %v715 = vmax.f32 %v651, 0.0
  %v716 = vmax.f32 %v652, 0.0
  %v717 = vmax.f32 %v653, 0.0
  %v718 = vmax.f32 %v654, 0.0
  %v719 = vmax.f32 %v655, 0.0
  %v720 = vmax.f32 %v656, 0.0
  %v721 = vmax.f32 %v657, 0.0
  %v722 = vmax.f32 %v658, 0.0
  %v723 = vmax.f32 %v659, 0.0
  %v724 = vmax.f32 %v660, 0.0
  %v725 = vmax.f32 %v661, 0.0
  %v726 = vmax.f32 %v662, 0.0
  %v727 = vmax.f32 %v663, 0.0
  %v728 = vmax.f32 %v664, 0.0
  %v729 = vmax.f32 %v665, 0.0
  %v730 = vmax.f32 %v666, 0.0
  %v731 = vmax.f32 %v667, 0.0
  %732 = vst [vmem:[%s4] sm:$0xff] %v668
  %733 = vst [vmem:[%s4 + $0x8] sm:$0xff] %v669
  %734 = vst [vmem:[%s4 + $0x10] sm:$0xff] %v670
  %735 = vst [vmem:[%s4 + $0x18] sm:$0xff] %v671
  %736 = vst [vmem:[%s4 + $0x20] sm:$0xff] %v672
  %737 = vst [vmem:[%s4 + $0x28] sm:$0xff] %v673
  %738 = vst [vmem:[%s4 + $0x30] sm:$0xff] %v674
  %739 = vst [vmem:[%s4 + $0x38] sm:$0xff] %v675
  %740 = vst [vmem:[%s4 + $0x40] sm:$0xff] %v676
  %741 = vst [vmem:[%s4 + $0x48] sm:$0xff] %v677
  %742 = vst [vmem:[%s4 + $0x50] sm:$0xff] %v678
  %743 = vst [vmem:[%s4 + $0x58] sm:$0xff] %v679
  %744 = vst [vmem:[%s4 + $0x60] sm:$0xff] %v680
  %745 = vst [vmem:[%s4 + $0x68] sm:$0xff] %v681
  %746 = vst [vmem:[%s4 + $0x70] sm:$0xff] %v682
  %747 = vst [vmem:[%s4 + $0x78] sm:$0xff] %v683
  %748 = vst [vmem:[%s4 + $0x80] sm:$0xff] %v684
  %749 = vst [vmem:[%s4 + $0x88] sm:$0xff] %v685
  %750 = vst [vmem:[%s4 + $0x90] sm:$0xff] %v686
  %751 = vst [vmem:[%s4 + $0x98] sm:$0xff] %v687
  %752 = vst [vmem:[%s4 + $0xa0] sm:$0xff] %v688
  %753 = vst [vmem:[%s4 + $0xa8] sm:$0xff] %v689
  %754 = vst [vmem:[%s4 + $0xb0] sm:$0xff] %v690
  %755 = vst [vmem:[%s4 + $0xb8] sm:$0xff] %v691
  %756 = vst [vmem:[%s4 + $0xc0] sm:$0xff] %v692
  %757 = vst [vmem:[%s4 + $0xc8] sm:$0xff] %v693
  %758 = vst [vmem:[%s4 + $0xd0] sm:$0xff] %v694
  %759 = vst [vmem:[%s4 + $0xd8] sm:$0xff] %v695
  %760 = vst [vmem:[%s4 + $0xe0] sm:$0xff] %v696
  %761 = vst [vmem:[%s4 + $0xe8] sm:$0xff] %v697
  %762 = vst [vmem:[%s4 + $0xf0] sm:$0xff] %v698
  %763 = vst [vmem:[%s4 + $0xf8] sm:$0xff] %v699
  %764 = vst [vmem:[%s4 + $0x100] sm:$0xff] %v700
  %765 = vst [vmem:[%s4 + $0x108] sm:$0xff] %v701
  %766 = vst [vmem:[%s4 + $0x110] sm:$0xff] %v702
  %767 = vst [vmem:[%s4 + $0x118] sm:$0xff] %v703
  %768 = vst [vmem:[%s4 + $0x120] sm:$0xff] %v704
  %769 = vst [vmem:[%s4 + $0x128] sm:$0xff] %v705
  %770 = vst [vmem:[%s4 + $0x130] sm:$0xff] %v706
  %771 = vst [vmem:[%s4 + $0x138] sm:$0xff] %v707
  %772 = vst [vmem:[%s4 + $0x140] sm:$0xff] %v708
  %773 = vst [vmem:[%s4 + $0x148] sm:$0xff] %v709
  %774 = vst [vmem:[%s4 + $0x150] sm:$0xff] %v710
  %775 = vst [vmem:[%s4 + $0x158] sm:$0xff] %v711
  %776 = vst [vmem:[%s4 + $0x160] sm:$0xff] %v712
  %777 = vst [vmem:[%s4 + $0x168] sm:$0xff] %v713
  %778 = vst [vmem:[%s4 + $0x170] sm:$0xff] %v714
  %779 = vst [vmem:[%s4 + $0x178] sm:$0xff] %v715
  %780 = vst [vmem:[%s4 + $0x180] sm:$0xff] %v716
  %781 = vst [vmem:[%s4 + $0x188] sm:$0xff] %v717
  %782 = vst [vmem:[%s4 + $0x190] sm:$0xff] %v718
  %783 = vst [vmem:[%s4 + $0x198] sm:$0xff] %v719
  %784 = vst [vmem:[%s4 + $0x1a0] sm:$0xff] %v720
  %785 = vst [vmem:[%s4 + $0x1a8] sm:$0xff] %v721
  %786 = vst [vmem:[%s4 + $0x1b0] sm:$0xff] %v722
  %787 = vst [vmem:[%s4 + $0x1b8] sm:$0xff] %v723
  %788 = vst [vmem:[%s4 + $0x1c0] sm:$0xff] %v724
  %789 = vst [vmem:[%s4 + $0x1c8] sm:$0xff] %v725
  %790 = vst [vmem:[%s4 + $0x1d0] sm:$0xff] %v726
  %791 = vst [vmem:[%s4 + $0x1d8] sm:$0xff] %v727
  %792 = vst [vmem:[%s4 + $0x1e0] sm:$0xff] %v728
  %793 = vst [vmem:[%s4 + $0x1e8] sm:$0xff] %v729
  %794 = vst [vmem:[%s4 + $0x1f0] sm:$0xff] %v730
  %795 = vst [vmem:[%s4 + $0x1f8] sm:$0xff] %v731
  // Predicated region
  $region18: #{conv_bn_relu.3} parent=0 // pred_check
    _
  $region19: #{conv_bn_relu.3} parent=0 // pred_check_branch
    %797 = sbr.rel (0) target = $region21
  $region20: #{conv_bn_relu.3} parent=0 // pred_region
    _
  $region21: #{conv_bn_relu.3} parent=0 // pred_fallthru
    _
  // Predicated region
  $region22: #{conv_bn_relu.3} parent=0 // pred_check
    _
  $region23: #{conv_bn_relu.3} parent=0 // pred_check_branch
    %799 = sbr.rel (0) target = $region25
  $region24: #{conv_bn_relu.3} parent=0 // pred_region
    _
  $region25: #{conv_bn_relu.3} parent=0 // pred_fallthru
    _

</llo_original>
